<compile_context>
chip_gen: v5e
topology: v5e:2x2
jax: 0.10.0
libtpu: 0.0.40
codegen_flags: <defaults>
</compile_context>

<pallas_src>
import functools

import jax
import jax.numpy as jnp
from jax.experimental import pallas as pl
from jax.experimental.pallas import tpu as pltpu


def _attention_kernel(x_ref, wqkv_ref, wproj_ref, bproj_ref, o_ref,
                      *, num_heads, head_dim, block_b, seq_len):
    H, hd, Bb, N = num_heads, head_dim, block_b, seq_len
    C = H * hd
    M = Bb * N            # rows handled by this grid step
    G = Bb * H            # (batch, head) pairs batched through the attention einsums

    x = x_ref[...].astype(jnp.bfloat16)        # (M, C)
    wqkv = wqkv_ref[...]                       # (C, 3C) bf16, softmax scale folded into q cols
    wproj = wproj_ref[...]                     # (C, C) bf16
    bproj = bproj_ref[...]                     # (1, C) f32

    # Fused QKV projection (qkv_bias=False): one MXU push, M x (K=C) x (N=3C), f32 accum.
    qkv = jnp.dot(x, wqkv, preferred_element_type=jnp.float32)        # (M, 3C) f32
    qkv = qkv.astype(jnp.bfloat16)             # cast once; head split runs on bf16

    # Head split: static slices stacked along a new leading (major) axis -> (G, N, hd),
    # with g = b*H + h.  Row offsets are multiples of N (tile-aligned); lane offsets are
    # multiples of hd.
    def split_heads(col0):
        parts = [qkv[b * N:(b + 1) * N, col0 + h * hd: col0 + (h + 1) * hd]
                 for b in range(Bb) for h in range(H)]
        return jnp.stack(parts, axis=0)                                # (G, N, hd) bf16

    q = split_heads(0)
    k = split_heads(C)
    v = split_heads(2 * C)

    # Scores for all (batch, head) pairs in one batched contraction over head_dim
    # (contracts the last dim of both operands -> no explicit k transpose).
    s = jnp.einsum('gqd,gkd->gqk', q, k,
                   preferred_element_type=jnp.float32)                 # (G, N, N) f32

    # Numerically stable softmax (f32); normalization deferred to the (N, hd) context.
    s_max = jnp.max(s, axis=-1, keepdims=True)                         # (G, N, 1)
    p = jnp.exp(s - s_max)                                             # unnormalized probs
    inv_l = pl.reciprocal(jnp.sum(p, axis=-1, keepdims=True),
                          approx=True)                                 # (G, N, 1), EUP
    # attn_drop is Dropout(0.0) -> identity.

    ctx = jnp.einsum('gqk,gkd->gqd', p.astype(jnp.bfloat16), v,
                     preferred_element_type=jnp.float32)               # (G, N, hd) f32
    ctx = (ctx * inv_l).astype(jnp.bfloat16)                           # normalize N*hd elems

    # Head merge folded into a single projection push: rebuild the (M, C) head-major slab
    # (lane concat per batch row-block, then row concat) and do ONE (M, C) @ (C, C) dot.
    rows = [jnp.concatenate([ctx[b * H + h] for h in range(H)], axis=-1)   # (N, C) bf16
            for b in range(Bb)]
    ctx_m = jnp.concatenate(rows, axis=0)                              # (M, C) bf16
    out = jnp.dot(ctx_m, wproj, preferred_element_type=jnp.float32) + bproj   # (M, C) f32
    # proj_drop is Dropout(0.0) -> identity.

    o_ref[...] = out.astype(o_ref.dtype)


def attention_supervised_image(x, w_qkv, w_proj, b_proj, *, num_heads, num_blocks=None):
    """x: (B, N, C) f32.  w_qkv: (C, 3C) = qkv.weight.T (qkv_bias=False).
    w_proj: (C, C) = proj.weight.T.  b_proj: (C,) = proj.bias."""
    B, N, C = x.shape
    head_dim = C // num_heads
    scale = head_dim ** (-0.5)

    if num_blocks is None:
        # >= 2 parallel grid steps when possible so both v7x TensorCores get work; on
        # single-TC v5e/v6e the extra ~0.35us step is negligible.
        num_blocks = 2 if (B >= 2 and B % 2 == 0) else B
    assert B % num_blocks == 0, (B, num_blocks)
    block_b = B // num_blocks

    # Fold the softmax scale into the Q columns of the QKV weight (zero in-kernel cost) and
    # cast the weight operands to bf16 (accumulation stays f32 inside the kernel).
    w_qkv_scaled = w_qkv.astype(jnp.float32).at[:, :C].multiply(scale)
    w_qkv_b = w_qkv_scaled.astype(jnp.bfloat16)                # (C, 3C)
    w_proj_b = w_proj.astype(jnp.bfloat16)                     # (C, C)
    b_proj_2d = b_proj.reshape(1, C).astype(jnp.float32)       # (1, C)

    # Pre-flatten the batch so each grid step gets a (block_b*N, C) row slab with no
    # in-kernel reshape (free XLA reshape outside the kernel).
    x_2d = x.reshape(B * N, C)

    kernel = functools.partial(_attention_kernel, num_heads=num_heads,
                               head_dim=head_dim, block_b=block_b, seq_len=N)

    out_2d = pl.pallas_call(
        kernel,
        out_shape=jax.ShapeDtypeStruct((B * N, C), x.dtype),
        grid=(num_blocks,),
        in_specs=[
            pl.BlockSpec((block_b * N, C), lambda i: (i, 0)),          # x row slab
            pl.BlockSpec((C, 3 * C), lambda i: (0, 0)),                # qkv weight (resident)
            pl.BlockSpec((C, C), lambda i: (0, 0)),                    # proj weight (resident)
            pl.BlockSpec((1, C), lambda i: (0, 0)),                    # proj bias
        ],
        out_specs=pl.BlockSpec((block_b * N, C), lambda i: (i, 0)),
        compiler_params=pltpu.CompilerParams(
            dimension_semantics=("parallel",)),
    )(x_2d, w_qkv_b, w_proj_b, b_proj_2d)
    return out_2d.reshape(B, N, C)


def _reference(x, w_qkv, w_proj, b_proj, *, num_heads):
    """Pure-JAX f32 reference mirroring the PyTorch forward exactly."""
    B, N, C = x.shape
    hd = C // num_heads
    scale = hd ** (-0.5)
    qkv = jnp.einsum("bnc,cd->bnd", x, w_qkv)                    # (B, N, 3C)
    qkv = qkv.reshape(B, N, 3, num_heads, hd).transpose(2, 0, 3, 1, 4)
    q, k, v = qkv[0], qkv[1], qkv[2]                             # (B, H, N, hd)
    attn = jnp.einsum("bhqd,bhkd->bhqk", q, k) * scale
    attn = jax.nn.softmax(attn, axis=-1)
    out = jnp.einsum("bhqk,bhkd->bhqd", attn, v)                 # (B, H, N, hd)
    out = out.transpose(0, 2, 1, 3).reshape(B, N, C)
    return jnp.einsum("bnc,cd->bnd", out, w_proj) + b_proj


def _run_check(B, N, C, num_heads, key):
    kx, kqkv, kproj, kb = jax.random.split(key, 4)
    x = jax.random.normal(kx, (B, N, C), dtype=jnp.float32)
    # nn.Linear weights stored pre-transposed as (in_features, out_features).
    w_qkv = jax.random.normal(kqkv, (C, 3 * C), dtype=jnp.float32) * 0.05
    w_proj = jax.random.normal(kproj, (C, C), dtype=jnp.float32) * 0.05
    b_proj = jax.random.normal(kb, (C,), dtype=jnp.float32) * 0.05

    out = attention_supervised_image(x, w_qkv, w_proj, b_proj, num_heads=num_heads)
    out = jax.block_until_ready(out)

    ref = _reference(x, w_qkv, w_proj, b_proj, num_heads=num_heads)
    assert out.shape == (B, N, C)
    # bf16 matmul operands (f32 accumulation) + approx reciprocal vs. f32 reference.
    assert jnp.allclose(out, ref, rtol=2e-2, atol=2e-2), f"mismatch vs. reference (B={B})"


if __name__ == "__main__":
    # Small shapes consistent with the module: N=8 tokens, C=32 channels,
    # num_heads=8 -> head_dim=4.
    N, C, num_heads = 8, 32, 8
    key = jax.random.PRNGKey(0)
    k2, k4 = jax.random.split(key)

    # B=2 -> grid=(2,), one batch per step (>= 2 parallel steps for v7x's two TensorCores).
    _run_check(2, N, C, num_heads, k2)
    # B=4 -> grid=(2,), two batches folded per step (exercises the batched Bb>1 path).
    _run_check(4, N, C, num_heads, k4)

    print("KERNEL_OK")
</pallas_src>

<mosaic_0001>
module attributes {stable_mosaic.version = 11 : i64} {
  func.func @_attention_kernel(%arg0: i32, %arg1: memref<8x32xf32, #tpu.memory_space<vmem>>, %arg2: memref<32x96xbf16, #tpu.memory_space<vmem>>, %arg3: memref<32x32xbf16, #tpu.memory_space<vmem>>, %arg4: memref<1x32xf32, #tpu.memory_space<vmem>>, %arg5: memref<8x32xf32, #tpu.memory_space<vmem>>) attributes {dimension_semantics = [#tpu.dimension_semantics<parallel>], iteration_bounds = array<i64: 2>, scalar_prefetch = 0 : i64, scratch_operands = 0 : i64, tpu.core_type = #tpu.core_type<tc>, window_params = [{transform_indices = @transform_0, window_bounds = array<i64: 8, 32>}, {pipeline_mode = #tpu.pipeline_mode<synchronous>, transform_indices = @transform_1, window_bounds = array<i64: 32, 96>}, {pipeline_mode = #tpu.pipeline_mode<synchronous>, transform_indices = @transform_2, window_bounds = array<i64: 32, 32>}, {pipeline_mode = #tpu.pipeline_mode<synchronous>, transform_indices = @transform_3, window_bounds = array<i64: 1, 32>}, {transform_indices = @transform_4, window_bounds = array<i64: 8, 32>}]} {
    %c0 = arith.constant 0 : index
    %c0_0 = arith.constant 0 : index
    %0 = vector.load %arg1[%c0, %c0_0] : memref<8x32xf32, #tpu.memory_space<vmem>>, vector<8x32xf32>
    %1 = arith.truncf %0 : vector<8x32xf32> to vector<8x32xbf16>
    %c0_1 = arith.constant 0 : index
    %c0_2 = arith.constant 0 : index
    %2 = vector.load %arg2[%c0_1, %c0_2] : memref<32x96xbf16, #tpu.memory_space<vmem>>, vector<32x96xbf16>
    %c0_3 = arith.constant 0 : index
    %c0_4 = arith.constant 0 : index
    %3 = vector.load %arg3[%c0_3, %c0_4] : memref<32x32xbf16, #tpu.memory_space<vmem>>, vector<32x32xbf16>
    %c0_5 = arith.constant 0 : index
    %c0_6 = arith.constant 0 : index
    %4 = vector.load %arg4[%c0_5, %c0_6] : memref<1x32xf32, #tpu.memory_space<vmem>>, vector<1x32xf32>
    %cst = arith.constant dense<0.000000e+00> : vector<8x96xf32>
    %5 = tpu.matmul %1, %2, %cst {dimension_numbers = #tpu.dot_dimension_numbers<[1], [0], [0], [1], [0, 0, 1, 1], [], []>} : vector<8x32xbf16>, vector<32x96xbf16>, vector<8x96xf32> -> vector<8x96xf32>
    %6 = arith.truncf %5 : vector<8x96xf32> to vector<8x96xbf16>
    %7 = vector.extract_strided_slice %6 {offsets = [0, 0], sizes = [8, 4], strides = [1, 1]} : vector<8x96xbf16> to vector<8x4xbf16>
    %8 = vector.extract_strided_slice %6 {offsets = [0, 4], sizes = [8, 4], strides = [1, 1]} : vector<8x96xbf16> to vector<8x4xbf16>
    %9 = vector.extract_strided_slice %6 {offsets = [0, 8], sizes = [8, 4], strides = [1, 1]} : vector<8x96xbf16> to vector<8x4xbf16>
    %10 = vector.extract_strided_slice %6 {offsets = [0, 12], sizes = [8, 4], strides = [1, 1]} : vector<8x96xbf16> to vector<8x4xbf16>
    %11 = vector.extract_strided_slice %6 {offsets = [0, 16], sizes = [8, 4], strides = [1, 1]} : vector<8x96xbf16> to vector<8x4xbf16>
    %12 = vector.extract_strided_slice %6 {offsets = [0, 20], sizes = [8, 4], strides = [1, 1]} : vector<8x96xbf16> to vector<8x4xbf16>
    %13 = vector.extract_strided_slice %6 {offsets = [0, 24], sizes = [8, 4], strides = [1, 1]} : vector<8x96xbf16> to vector<8x4xbf16>
    %14 = vector.extract_strided_slice %6 {offsets = [0, 28], sizes = [8, 4], strides = [1, 1]} : vector<8x96xbf16> to vector<8x4xbf16>
    %15 = vector.shape_cast %7 : vector<8x4xbf16> to vector<1x8x4xbf16>
    %16 = vector.shape_cast %8 : vector<8x4xbf16> to vector<1x8x4xbf16>
    %17 = vector.shape_cast %9 : vector<8x4xbf16> to vector<1x8x4xbf16>
    %18 = vector.shape_cast %10 : vector<8x4xbf16> to vector<1x8x4xbf16>
    %19 = vector.shape_cast %11 : vector<8x4xbf16> to vector<1x8x4xbf16>
    %20 = vector.shape_cast %12 : vector<8x4xbf16> to vector<1x8x4xbf16>
    %21 = vector.shape_cast %13 : vector<8x4xbf16> to vector<1x8x4xbf16>
    %22 = vector.shape_cast %14 : vector<8x4xbf16> to vector<1x8x4xbf16>
    %23 = tpu.concatenate %15, %16, %17, %18, %19, %20, %21, %22 in 0 : vector<1x8x4xbf16>, vector<1x8x4xbf16>, vector<1x8x4xbf16>, vector<1x8x4xbf16>, vector<1x8x4xbf16>, vector<1x8x4xbf16>, vector<1x8x4xbf16>, vector<1x8x4xbf16> -> vector<8x8x4xbf16>
    %24 = vector.extract_strided_slice %6 {offsets = [0, 32], sizes = [8, 4], strides = [1, 1]} : vector<8x96xbf16> to vector<8x4xbf16>
    %25 = vector.extract_strided_slice %6 {offsets = [0, 36], sizes = [8, 4], strides = [1, 1]} : vector<8x96xbf16> to vector<8x4xbf16>
    %26 = vector.extract_strided_slice %6 {offsets = [0, 40], sizes = [8, 4], strides = [1, 1]} : vector<8x96xbf16> to vector<8x4xbf16>
    %27 = vector.extract_strided_slice %6 {offsets = [0, 44], sizes = [8, 4], strides = [1, 1]} : vector<8x96xbf16> to vector<8x4xbf16>
    %28 = vector.extract_strided_slice %6 {offsets = [0, 48], sizes = [8, 4], strides = [1, 1]} : vector<8x96xbf16> to vector<8x4xbf16>
    %29 = vector.extract_strided_slice %6 {offsets = [0, 52], sizes = [8, 4], strides = [1, 1]} : vector<8x96xbf16> to vector<8x4xbf16>
    %30 = vector.extract_strided_slice %6 {offsets = [0, 56], sizes = [8, 4], strides = [1, 1]} : vector<8x96xbf16> to vector<8x4xbf16>
    %31 = vector.extract_strided_slice %6 {offsets = [0, 60], sizes = [8, 4], strides = [1, 1]} : vector<8x96xbf16> to vector<8x4xbf16>
    %32 = vector.shape_cast %24 : vector<8x4xbf16> to vector<1x8x4xbf16>
    %33 = vector.shape_cast %25 : vector<8x4xbf16> to vector<1x8x4xbf16>
    %34 = vector.shape_cast %26 : vector<8x4xbf16> to vector<1x8x4xbf16>
    %35 = vector.shape_cast %27 : vector<8x4xbf16> to vector<1x8x4xbf16>
    %36 = vector.shape_cast %28 : vector<8x4xbf16> to vector<1x8x4xbf16>
    %37 = vector.shape_cast %29 : vector<8x4xbf16> to vector<1x8x4xbf16>
    %38 = vector.shape_cast %30 : vector<8x4xbf16> to vector<1x8x4xbf16>
    %39 = vector.shape_cast %31 : vector<8x4xbf16> to vector<1x8x4xbf16>
    %40 = tpu.concatenate %32, %33, %34, %35, %36, %37, %38, %39 in 0 : vector<1x8x4xbf16>, vector<1x8x4xbf16>, vector<1x8x4xbf16>, vector<1x8x4xbf16>, vector<1x8x4xbf16>, vector<1x8x4xbf16>, vector<1x8x4xbf16>, vector<1x8x4xbf16> -> vector<8x8x4xbf16>
    %41 = vector.extract_strided_slice %6 {offsets = [0, 64], sizes = [8, 4], strides = [1, 1]} : vector<8x96xbf16> to vector<8x4xbf16>
    %42 = vector.extract_strided_slice %6 {offsets = [0, 68], sizes = [8, 4], strides = [1, 1]} : vector<8x96xbf16> to vector<8x4xbf16>
    %43 = vector.extract_strided_slice %6 {offsets = [0, 72], sizes = [8, 4], strides = [1, 1]} : vector<8x96xbf16> to vector<8x4xbf16>
    %44 = vector.extract_strided_slice %6 {offsets = [0, 76], sizes = [8, 4], strides = [1, 1]} : vector<8x96xbf16> to vector<8x4xbf16>
    %45 = vector.extract_strided_slice %6 {offsets = [0, 80], sizes = [8, 4], strides = [1, 1]} : vector<8x96xbf16> to vector<8x4xbf16>
    %46 = vector.extract_strided_slice %6 {offsets = [0, 84], sizes = [8, 4], strides = [1, 1]} : vector<8x96xbf16> to vector<8x4xbf16>
    %47 = vector.extract_strided_slice %6 {offsets = [0, 88], sizes = [8, 4], strides = [1, 1]} : vector<8x96xbf16> to vector<8x4xbf16>
    %48 = vector.extract_strided_slice %6 {offsets = [0, 92], sizes = [8, 4], strides = [1, 1]} : vector<8x96xbf16> to vector<8x4xbf16>
    %49 = vector.shape_cast %41 : vector<8x4xbf16> to vector<1x8x4xbf16>
    %50 = vector.shape_cast %42 : vector<8x4xbf16> to vector<1x8x4xbf16>
    %51 = vector.shape_cast %43 : vector<8x4xbf16> to vector<1x8x4xbf16>
    %52 = vector.shape_cast %44 : vector<8x4xbf16> to vector<1x8x4xbf16>
    %53 = vector.shape_cast %45 : vector<8x4xbf16> to vector<1x8x4xbf16>
    %54 = vector.shape_cast %46 : vector<8x4xbf16> to vector<1x8x4xbf16>
    %55 = vector.shape_cast %47 : vector<8x4xbf16> to vector<1x8x4xbf16>
    %56 = vector.shape_cast %48 : vector<8x4xbf16> to vector<1x8x4xbf16>
    %57 = tpu.concatenate %49, %50, %51, %52, %53, %54, %55, %56 in 0 : vector<1x8x4xbf16>, vector<1x8x4xbf16>, vector<1x8x4xbf16>, vector<1x8x4xbf16>, vector<1x8x4xbf16>, vector<1x8x4xbf16>, vector<1x8x4xbf16>, vector<1x8x4xbf16> -> vector<8x8x4xbf16>
    "tpu.trace_start"() <{level = 10 : i32, message = "gqd,gkd->gqk"}> : () -> ()
    %cst_7 = arith.constant dense<0.000000e+00> : vector<8x8x8xf32>
    %58 = tpu.matmul %23, %40, %cst_7 {dimension_numbers = #tpu.dot_dimension_numbers<[2], [2], [1], [1], [0, 0, 0, 1, 1, 1], [0], [0]>} : vector<8x8x4xbf16>, vector<8x8x4xbf16>, vector<8x8x8xf32> -> vector<8x8x8xf32>
    "tpu.trace_stop"() : () -> ()
    %cst_8 = arith.constant dense<0xFF800000> : vector<8x8xf32>
    %59 = vector.multi_reduction <maximumf>, %58, %cst_8 [2] : vector<8x8x8xf32> to vector<8x8xf32>
    %60 = vector.shape_cast %59 : vector<8x8xf32> to vector<8x8x1xf32>
    %61 = vector.broadcast %60 : vector<8x8x1xf32> to vector<8x8x8xf32>
    %62 = arith.subf %58, %61 : vector<8x8x8xf32>
    %63 = math.exp %62 : vector<8x8x8xf32>
    %cst_9 = arith.constant dense<0.000000e+00> : vector<8x8xf32>
    %64 = vector.multi_reduction <add>, %63, %cst_9 [2] : vector<8x8x8xf32> to vector<8x8xf32>
    %65 = vector.shape_cast %64 : vector<8x8xf32> to vector<8x8x1xf32>
    %66 = tpu.reciprocal %65 {approx = true} : vector<8x8x1xf32> -> vector<8x8x1xf32>
    %67 = arith.truncf %63 : vector<8x8x8xf32> to vector<8x8x8xbf16>
    "tpu.trace_start"() <{level = 10 : i32, message = "gqk,gkd->gqd"}> : () -> ()
    %cst_10 = arith.constant dense<0.000000e+00> : vector<8x8x4xf32>
    %68 = tpu.matmul %67, %57, %cst_10 {dimension_numbers = #tpu.dot_dimension_numbers<[2], [1], [1], [2], [0, 0, 0, 1, 1, 2], [0], [0]>} : vector<8x8x8xbf16>, vector<8x8x4xbf16>, vector<8x8x4xf32> -> vector<8x8x4xf32>
    "tpu.trace_stop"() : () -> ()
    %69 = vector.broadcast %66 : vector<8x8x1xf32> to vector<8x8x4xf32>
    %70 = arith.mulf %68, %69 : vector<8x8x4xf32>
    %71 = arith.truncf %70 : vector<8x8x4xf32> to vector<8x8x4xbf16>
    %72 = vector.extract_strided_slice %71 {offsets = [0, 0, 0], sizes = [1, 8, 4], strides = [1, 1, 1]} : vector<8x8x4xbf16> to vector<1x8x4xbf16>
    %73 = vector.shape_cast %72 : vector<1x8x4xbf16> to vector<8x4xbf16>
    %74 = vector.extract_strided_slice %71 {offsets = [1, 0, 0], sizes = [1, 8, 4], strides = [1, 1, 1]} : vector<8x8x4xbf16> to vector<1x8x4xbf16>
    %75 = vector.shape_cast %74 : vector<1x8x4xbf16> to vector<8x4xbf16>
    %76 = vector.extract_strided_slice %71 {offsets = [2, 0, 0], sizes = [1, 8, 4], strides = [1, 1, 1]} : vector<8x8x4xbf16> to vector<1x8x4xbf16>
    %77 = vector.shape_cast %76 : vector<1x8x4xbf16> to vector<8x4xbf16>
    %78 = vector.extract_strided_slice %71 {offsets = [3, 0, 0], sizes = [1, 8, 4], strides = [1, 1, 1]} : vector<8x8x4xbf16> to vector<1x8x4xbf16>
    %79 = vector.shape_cast %78 : vector<1x8x4xbf16> to vector<8x4xbf16>
    %80 = vector.extract_strided_slice %71 {offsets = [4, 0, 0], sizes = [1, 8, 4], strides = [1, 1, 1]} : vector<8x8x4xbf16> to vector<1x8x4xbf16>
    %81 = vector.shape_cast %80 : vector<1x8x4xbf16> to vector<8x4xbf16>
    %82 = vector.extract_strided_slice %71 {offsets = [5, 0, 0], sizes = [1, 8, 4], strides = [1, 1, 1]} : vector<8x8x4xbf16> to vector<1x8x4xbf16>
    %83 = vector.shape_cast %82 : vector<1x8x4xbf16> to vector<8x4xbf16>
    %84 = vector.extract_strided_slice %71 {offsets = [6, 0, 0], sizes = [1, 8, 4], strides = [1, 1, 1]} : vector<8x8x4xbf16> to vector<1x8x4xbf16>
    %85 = vector.shape_cast %84 : vector<1x8x4xbf16> to vector<8x4xbf16>
    %86 = vector.extract_strided_slice %71 {offsets = [7, 0, 0], sizes = [1, 8, 4], strides = [1, 1, 1]} : vector<8x8x4xbf16> to vector<1x8x4xbf16>
    %87 = vector.shape_cast %86 : vector<1x8x4xbf16> to vector<8x4xbf16>
    %88 = tpu.concatenate %73, %75, %77, %79, %81, %83, %85, %87 in 1 : vector<8x4xbf16>, vector<8x4xbf16>, vector<8x4xbf16>, vector<8x4xbf16>, vector<8x4xbf16>, vector<8x4xbf16>, vector<8x4xbf16>, vector<8x4xbf16> -> vector<8x32xbf16>
    %cst_11 = arith.constant dense<0.000000e+00> : vector<8x32xf32>
    %89 = tpu.matmul %88, %3, %cst_11 {dimension_numbers = #tpu.dot_dimension_numbers<[1], [0], [0], [1], [0, 0, 1, 1], [], []>} : vector<8x32xbf16>, vector<32x32xbf16>, vector<8x32xf32> -> vector<8x32xf32>
    %90 = vector.broadcast %4 : vector<1x32xf32> to vector<8x32xf32>
    %91 = arith.addf %89, %90 : vector<8x32xf32>
    %c0_12 = arith.constant 0 : index
    %c0_13 = arith.constant 0 : index
    %92 = vector.load %arg5[%c0_12, %c0_13] : memref<8x32xf32, #tpu.memory_space<vmem>>, vector<8x32xf32>
    tpu.vector_store %arg5[%c0_12, %c0_13], %91 {strides = array<i32>} : memref<8x32xf32, #tpu.memory_space<vmem>>, vector<8x32xf32>,
    return
  }
  func.func @transform_0(%arg0: i32) -> (i32, i32) {
    %c0_i32 = arith.constant 0 : i32
    %c0_i32_0 = arith.constant 0 : i32
    return %arg0, %c0_i32 : i32, i32
  }
  func.func @transform_1(%arg0: i32) -> (i32, i32) {
    %c0_i32 = arith.constant 0 : i32
    %c0_i32_0 = arith.constant 0 : i32
    %c0_i32_1 = arith.constant 0 : i32
    return %c0_i32, %c0_i32_0 : i32, i32
  }
  func.func @transform_2(%arg0: i32) -> (i32, i32) {
    %c0_i32 = arith.constant 0 : i32
    %c0_i32_0 = arith.constant 0 : i32
    %c0_i32_1 = arith.constant 0 : i32
    return %c0_i32, %c0_i32_0 : i32, i32
  }
  func.func @transform_3(%arg0: i32) -> (i32, i32) {
    %c0_i32 = arith.constant 0 : i32
    %c0_i32_0 = arith.constant 0 : i32
    %c0_i32_1 = arith.constant 0 : i32
    return %c0_i32, %c0_i32_0 : i32, i32
  }
  func.func @transform_4(%arg0: i32) -> (i32, i32) {
    %c0_i32 = arith.constant 0 : i32
    %c0_i32_0 = arith.constant 0 : i32
    return %arg0, %c0_i32 : i32, i32
  }
}

</mosaic_0001>

<llo_original>
// kernel: tpu_custom_call.1
$region0: #{tpu_custom_call.1}
  #allocation0 [shape = 'u32[]', space=smem, size = 0x4, offset = 0x4, fixed_abs, tag = 'smem constant byte address 0x4 - core index']
  #allocation1 [shape = 'u32[72,128]{1,0:T(1,128)}', space=vmem, size = 0x9000, scoped, tag = 'internal scratch']
  %s0 = inlined_call_operand.hbm [shape: f32[16,32], index: 0, kind: input, shape index: {}]
  %s1 = inlined_call_operand.hbm [shape: bf16[32,96], index: 1, kind: input, shape index: {}]
  %s2 = inlined_call_operand.hbm [shape: bf16[32,32], index: 2, kind: input, shape index: {}]
  %s3 = inlined_call_operand.vmem [shape: f32[1,32], index: 3, kind: input, shape index: {}]
  %s4 = inlined_call_operand.hbm [shape: f32[16,32], index: 4, kind: output, shape index: {}]
  %s5 = sld [smem:[#allocation0]]
  $region61: #{tpu_custom_call.1} parent=0
    _
  %s7 = ssub.s32 1, %s5
  %s8 = scalar_select 0, %s7, %s5
  $region1: #{tpu_custom_call.1} parent=0
    #allocation2 [shape = 'u8[8192]{0}', space=vmem, size = 0x2000, scoped, tag = 'input window, operand 0']
    #allocation3 [shape = 's32[2]{0}', space=sflag, size = 0x8, scoped, tag = 'scoped memory for tpu_custom_call.1']
    #allocation4 [shape = 's32[2]{0}', space=sflag, size = 0x8, scoped, tag = 'scoped memory for tpu_custom_call.1']
    #allocation5 [shape = 'u8[8192]{0}', space=vmem, size = 0x2000, scoped, tag = 'input window, operand 1, single buffered']
    #allocation6 [shape = 's32[1]{0}', space=sflag, size = 0x4, scoped, tag = 'scoped memory for tpu_custom_call.1']
    #allocation7 [shape = 'u8[8192]{0}', space=vmem, size = 0x2000, scoped, tag = 'input window, operand 2, single buffered']
    #allocation8 [shape = 'u8[8192]{0}', space=vmem, size = 0x2000, scoped, tag = 'output window, operand 0']
    %9 = vsyncpa [#allocation3], 0
    %s10 = scalar_lea.sflag [#allocation3], 1
    %11 = vsyncpa %s10, 0
    %12 = vsyncpa [#allocation6], 0
    %13 = vsyncpa [#allocation4], 0
    %s14 = scalar_lea.sflag [#allocation4], 1
    %15 = vsyncpa %s14, 0
    loop: start=0, step=1, limit=4
    $region2: #{tpu_custom_call.1} parent=1 // loop_pre_header
      _
    $region3: #{tpu_custom_call.1} parent=1 // loop_header
      %s17 = sphi 0, %s21
      %p18 = scmp.ge.s32.totalorder %s17, 4
      %s27 = sphi 0, %s29
      %s30 = sphi 0, %s27
      %s31 = sphi 0, %s30
      %s47 = sphi 0, %s31
      %s51 = sphi 0, %s51
      %s53 = sphi 0, %s51
      %s54 = sphi 0, %s53
      %s68 = sphi 0, %s54
      %s72 = sphi 0, %s72
      %s74 = sphi 0, %s72
      %s75 = sphi 0, %s74
      %s89 = sphi 0, %s75
      %s93 = sphi 0, %s93
      %s95 = sphi 0, %s93
      %s96 = sphi 0, %s95
      %s110 = sphi 0, %s96
      %s116 = sphi 0, %s118
      %s119 = sphi 0, %s116
      %s120 = sphi 0, %s119
      %s136 = sphi 0, %s120
    $region4: #{tpu_custom_call.1} parent=1 // loop_header_branch
      %20 = sbr.rel (%p18) target = $region8
    $region5: #{tpu_custom_call.1} parent=1 // loop_body
      %s22 = ssub.s32 %s17, 1
      %s23 = ssub.s32 %s17, 2
      %s24 = sadd.s32 %s17, 1
      %s25 = ssub.s32 %s17, %s24
      %p26 = scmp.eq.s32.totalorder %s25, 0
      %s28 = sadd.s32 %s27, 1
      %s29 = scalar_select %p26, %s27, %s28
      %p32 = pneg %p26
      %p33 = scmp.eq.s32.totalorder %s17, 1
      %p34 = por %p32, %p33
      %p35 = scmp.ne.s32.totalorder %s27, %s30
      %p36 = scmp.eq.s32.totalorder %s17, 0
      %p37 = por %p35, %p36
      %p38 = scmp.ne.s32.totalorder %s27, %s30
      %p39 = scmp.eq.s32.totalorder %s22, 1
      %p40 = por %p38, %p39
      %p41 = scmp.ne.s32.totalorder %s30, %s31
      %p42 = scmp.eq.s32.totalorder %s22, 0
      %p43 = por %p41, %p42
      %p44 = scmp.ne.s32.totalorder %s30, %s31
      %p45 = scmp.eq.s32.totalorder %s23, 1
      %p46 = por %p44, %p45
      %p48 = scmp.ne.s32.totalorder %s31, %s47
      %p49 = scmp.eq.s32.totalorder %s23, 0
      %p50 = por %p48, %p49
      %s52 = sadd.s32 %s51, 1
      %p55 = scmp.eq.s32.totalorder %s17, 1
      %p56 = scmp.ne.s32.totalorder %s51, %s53
      %p57 = scmp.eq.s32.totalorder %s17, 0
      %p58 = por %p56, %p57
      %p59 = scmp.ne.s32.totalorder %s51, %s53
      %p60 = scmp.eq.s32.totalorder %s22, 1
      %p61 = por %p59, %p60
      %p62 = scmp.ne.s32.totalorder %s53, %s54
      %p63 = scmp.eq.s32.totalorder %s22, 0
      %p64 = por %p62, %p63
      %p65 = scmp.ne.s32.totalorder %s53, %s54
      %p66 = scmp.eq.s32.totalorder %s23, 1
      %p67 = por %p65, %p66
      %p69 = scmp.ne.s32.totalorder %s54, %s68
      %p70 = scmp.eq.s32.totalorder %s23, 0
      %p71 = por %p69, %p70
      %s73 = sadd.s32 %s72, 1
      %p76 = scmp.eq.s32.totalorder %s17, 1
      %p77 = scmp.ne.s32.totalorder %s72, %s74
      %p78 = scmp.eq.s32.totalorder %s17, 0
      %p79 = por %p77, %p78
      %p80 = scmp.ne.s32.totalorder %s72, %s74
      %p81 = scmp.eq.s32.totalorder %s22, 1
      %p82 = por %p80, %p81
      %p83 = scmp.ne.s32.totalorder %s74, %s75
      %p84 = scmp.eq.s32.totalorder %s22, 0
      %p85 = por %p83, %p84
      %p86 = scmp.ne.s32.totalorder %s74, %s75
      %p87 = scmp.eq.s32.totalorder %s23, 1
      %p88 = por %p86, %p87
      %p90 = scmp.ne.s32.totalorder %s75, %s89
      %p91 = scmp.eq.s32.totalorder %s23, 0
      %p92 = por %p90, %p91
      %s94 = sadd.s32 %s93, 1
      %p97 = scmp.eq.s32.totalorder %s17, 1
      %p98 = scmp.ne.s32.totalorder %s93, %s95
      %p99 = scmp.eq.s32.totalorder %s17, 0
      %p100 = por %p98, %p99
      %p101 = scmp.ne.s32.totalorder %s93, %s95
      %p102 = scmp.eq.s32.totalorder %s22, 1
      %p103 = por %p101, %p102
      %p104 = scmp.ne.s32.totalorder %s95, %s96
      %p105 = scmp.eq.s32.totalorder %s22, 0
      %p106 = por %p104, %p105
      %p107 = scmp.ne.s32.totalorder %s95, %s96
      %p108 = scmp.eq.s32.totalorder %s23, 1
      %p109 = por %p107, %p108
      %p111 = scmp.ne.s32.totalorder %s96, %s110
      %p112 = scmp.eq.s32.totalorder %s23, 0
      %p113 = por %p111, %p112
      %s114 = ssub.s32 %s17, %s24
      %p115 = scmp.eq.s32.totalorder %s114, 0
      %s117 = sadd.s32 %s116, 1
      %s118 = scalar_select %p115, %s116, %s117
      %p121 = pneg %p115
      %p122 = scmp.eq.s32.totalorder %s17, 1
      %p123 = por %p121, %p122
      %p124 = scmp.ne.s32.totalorder %s116, %s119
      %p125 = scmp.eq.s32.totalorder %s17, 0
      %p126 = por %p124, %p125
      %p127 = scmp.ne.s32.totalorder %s116, %s119
      %p128 = scmp.eq.s32.totalorder %s22, 1
      %p129 = por %p127, %p128
      %p130 = scmp.ne.s32.totalorder %s119, %s120
      %p131 = scmp.eq.s32.totalorder %s22, 0
      %p132 = por %p130, %p131
      %p133 = scmp.ne.s32.totalorder %s119, %s120
      %p134 = scmp.eq.s32.totalorder %s23, 1
      %p135 = por %p133, %p134
      %p137 = scmp.ne.s32.totalorder %s120, %s136
      %p138 = scmp.eq.s32.totalorder %s23, 0
      %p139 = por %p137, %p138
      %p140 = scmp.le.s32.totalorder 1, %s17
      %p141 = scmp.lt.s32.totalorder %s17, 3
      %p142 = pnand %p140, %p141
      %p143 = pneg %p142
      // Predicated region
      $region9: #{tpu_custom_call.1} parent=5 // pred_check
        _
      $region10: #{tpu_custom_call.1} parent=5 // pred_check_branch
        %145 = sbr.rel (%p142) target = $region12
      $region11: #{tpu_custom_call.1} parent=5 // pred_region
        %s146 = ssub.s32 %s17, 1
        // Predicated region
        $region13: #{tpu_custom_call.1} parent=11 // pred_check
          %p147 = pneg %p64
        $region14: #{tpu_custom_call.1} parent=11 // pred_check_branch
          %149 = sbr.rel (%p147) target = $region16
        $region15: #{tpu_custom_call.1} parent=11 // pred_region
          %151 = vsyncadd [#allocation6], 0
          %s152 = sshll.u32 %s1, 4
          %s153 = int_to_ptr.hbm [resolvable:$true] %s152
          %s154 = sshll.u32 [#allocation5], 4
          %s155 = int_to_ptr.vmem [resolvable:$true] %s154
          %160 = dma.hbm_to_vmem [thread:$0]  %s153, 256, %s155, [#allocation6], 64, 64, 4
        $region16: #{tpu_custom_call.1} parent=11 // pred_fallthru
          _
        // Predicated region
        $region17: #{tpu_custom_call.1} parent=11 // pred_check
          %p161 = pneg %p85
        $region18: #{tpu_custom_call.1} parent=11 // pred_check_branch
          %163 = sbr.rel (%p161) target = $region20
        $region19: #{tpu_custom_call.1} parent=11 // pred_region
          %165 = vsyncadd [#allocation6], 0
          %s166 = sshll.u32 %s2, 4
          %s167 = int_to_ptr.hbm [resolvable:$true] %s166
          %s168 = sshll.u32 [#allocation7], 4
          %s169 = int_to_ptr.vmem [resolvable:$true] %s168
          %174 = dma.hbm_to_vmem [thread:$0]  %s167, 256, %s169, [#allocation6], 64, 64, 4
        $region20: #{tpu_custom_call.1} parent=11 // pred_fallthru
          _
        // Predicated region
        $region21: #{tpu_custom_call.1} parent=11 // pred_check
          %p175 = pneg %p106
        $region22: #{tpu_custom_call.1} parent=11 // pred_check_branch
          %177 = sbr.rel (%p175) target = $region24
        $region23: #{tpu_custom_call.1} parent=11 // pred_region
          _
        $region24: #{tpu_custom_call.1} parent=11 // pred_fallthru
          _
      $region12: #{tpu_custom_call.1} parent=5 // pred_fallthru
        _
      %p178 = scmp.lt.s32.totalorder %s17, 2
      // Predicated region
      $region25: #{tpu_custom_call.1} parent=5 // pred_check
        %p179 = pneg %p178
      $region26: #{tpu_custom_call.1} parent=5 // pred_check_branch
        %181 = sbr.rel (%p179) target = $region28
      $region27: #{tpu_custom_call.1} parent=5 // pred_region
        // Predicated region
        $region29: #{tpu_custom_call.1} parent=27 // pred_check
          %p182 = pneg %p37
        $region30: #{tpu_custom_call.1} parent=27 // pred_check_branch
          %184 = sbr.rel (%p182) target = $region32
        $region31: #{tpu_custom_call.1} parent=27 // pred_region
          %s185 = sand.u32 %s27, 1
          %s186 = scalar_lea.sflag [#allocation3], %s185
          %s187 = sand.u32 %s27, 1
          %s188 = smul.addr %s187, 8
          %s189 = scalar_lea.vmem [#allocation2], %s188
          %191 = vsyncadd %s186, 0
          %s192 = smul.addr %s17, 8
          %s193 = scalar_lea.hbm %s0, %s192
          %s195 = sshll.u32 %s193, 4
          %s196 = int_to_ptr.hbm [resolvable:$true] %s195
          %s197 = sshll.u32 %s189, 4
          %s198 = int_to_ptr.vmem [resolvable:$true] %s197
          %200 = dma.hbm_to_vmem [thread:$0]  %s196, 128, %s198, %s186
        $region32: #{tpu_custom_call.1} parent=27 // pred_fallthru
          _
      $region28: #{tpu_custom_call.1} parent=5 // pred_fallthru
        _
      %p201 = scmp.le.s32.totalorder 1, %s17
      %p202 = scmp.lt.s32.totalorder %s17, 3
      %p203 = pnand %p201, %p202
      %p204 = pneg %p203
      // Predicated region
      $region33: #{tpu_custom_call.1} parent=5 // pred_check
        _
      $region34: #{tpu_custom_call.1} parent=5 // pred_check_branch
        %206 = sbr.rel (%p203) target = $region36
      $region35: #{tpu_custom_call.1} parent=5 // pred_region
        %s207 = ssub.s32 %s17, 1
        %s208 = sand.u32 %s30, 1
        %s209 = scalar_lea.sflag [#allocation3], %s208
        %s210 = sand.u32 %s30, 1
        %s211 = smul.addr %s210, 8
        %s212 = scalar_lea.vmem [#allocation2], %s211
        // Predicated region
        $region37: #{tpu_custom_call.1} parent=35 // pred_check
          %p213 = pneg %p43
        $region38: #{tpu_custom_call.1} parent=35 // pred_check_branch
          %215 = sbr.rel (%p213) target = $region40
        $region39: #{tpu_custom_call.1} parent=35 // pred_region
          %217 = dma.done %s209, 128
        $region40: #{tpu_custom_call.1} parent=35 // pred_fallthru
          _
        // Predicated region
        $region41: #{tpu_custom_call.1} parent=35 // pred_check
          %p218 = pneg %p64
        $region42: #{tpu_custom_call.1} parent=35 // pred_check_branch
          %220 = sbr.rel (%p218) target = $region44
        $region43: #{tpu_custom_call.1} parent=35 // pred_region
          %222 = dma.done [#allocation6], 256
        $region44: #{tpu_custom_call.1} parent=35 // pred_fallthru
          _
        // Predicated region
        $region45: #{tpu_custom_call.1} parent=35 // pred_check
          %p223 = pneg %p85
        $region46: #{tpu_custom_call.1} parent=35 // pred_check_branch
          %225 = sbr.rel (%p223) target = $region48
        $region47: #{tpu_custom_call.1} parent=35 // pred_region
          %227 = dma.done [#allocation6], 256
        $region48: #{tpu_custom_call.1} parent=35 // pred_fallthru
          _
        %s228 = sand.u32 %s30, 1
        %s229 = scalar_lea.sflag [#allocation3], %s228
        %s230 = sand.u32 %s30, 1
        %s231 = smul.addr %s230, 8
        %s232 = scalar_lea.vmem [#allocation2], %s231
        %p233 = pneg %p43
        %p234 = pneg %p40
        %p235 = pneg %p64
        %p236 = pneg %p61
        %p237 = pneg %p85
        %p238 = pneg %p82
        %p239 = pneg %p106
        %p240 = pneg %p103
        %p241 = pneg %p132
        %p242 = pneg %p129
        %s243 = sand.u32 %s119, 1
        %s244 = scalar_lea.sflag [#allocation4], %s243
        %s245 = sand.u32 %s119, 1
        %s246 = smul.addr %s245, 8
        %s247 = scalar_lea.vmem [#allocation8], %s246
        %v249 = vld [vmem:[%s212] sm:$0xff]
        %v250 = vpack.c.bf16 %v249, %v249
        %v251 = vld [vmem:[#allocation5] sm:$0xf]
        %v252 = vld [vmem:[#allocation5 + $0x4] sm:$0xf]
        %v253 = vld [vmem:[#allocation5 + $0x8] sm:$0xf]
        %v254 = vld [vmem:[#allocation5 + $0xc] sm:$0xf]
        %v255 = vld [vmem:[#allocation7] sm:$0xf]
        %v256 = vld [vmem:[#allocation7 + $0x4] sm:$0xf]
        %v257 = vld [vmem:[#allocation7 + $0x8] sm:$0xf]
        %v258 = vld [vmem:[#allocation7 + $0xc] sm:$0xf]
        %v259 = vld [vmem:[%s3] sm:$0x1]
        %v264 = vunpack.c.l.b16 %v251
        %v265 = vunpack.c.l.b16 %v252
        %v266 = vunpack.c.l.b16 %v253
        %v267 = vunpack.c.l.b16 %v254
        %v268 = vpack.c.b16 %v265, %v264
        %v269 = vpack.c.b16 %v267, %v266
        %vm272 = vcmask 261120
        %v274 = vsel %vm272, %v250, 0
        %276 = vmatpush.bf16.msra.mxu0 0
        %277 = vmatpush.bf16.msra.mxu0 0
        %278 = vmatpush.bf16.msra.mxu0 0
        %279 = vmatpush.bf16.msra.mxu0 0
        %280 = vmatpush.bf16.msra.mxu0 0
        %281 = vmatpush.bf16.msra.mxu0 0
        %282 = vmatpush.bf16.msra.mxu0 %v269
        %283 = vmatpush.bf16.msra.mxu0 %v268
        %284 = vmatmul.bf16.gmra.mxu0 %v274
        %v285 = vpop.f32.mrf.mxu0
        %v286 = vadd.f32 0.0, %v285
        %v287 = vpop.f32.mrf.mxu0
        %288 = vdwg.mxu0
        %v289 = vpack.c.bf16 %v286, %v286
        %291 = vrot.lane.b32.xlu0 %v289, 124
        %v292 = vpop.permute.xlu0 %291
        %293 = vrot.lane.b32.xlu0 %v289, 120
        %v294 = vpop.permute.xlu0 %293
        %295 = vrot.lane.b32.xlu0 %v289, 116
        %v296 = vpop.permute.xlu0 %295
        %297 = vrot.lane.b32.xlu0 %v289, 112
        %v298 = vpop.permute.xlu0 %297
        %299 = vrot.lane.b32.xlu0 %v289, 108
        %v300 = vpop.permute.xlu0 %299
        %301 = vrot.lane.b32.xlu0 %v289, 104
        %v302 = vpop.permute.xlu0 %301
        %303 = vrot.lane.b32.xlu0 %v289, 100
        %v304 = vpop.permute.xlu0 %303
        %v305 = vunpack.c.l.b16 %v289
        %v306 = vpack.c.b16 %v305, %v305
        %307 = vrot.lane.b32.xlu0 %v306, 96
        %v308 = vpop.permute.xlu0 %307
        %vm309 = vcmask 31744
        %v311 = vsel %vm309, %v289, 0
        %v314 = vsel %vm309, %v308, 0
        %316 = vmatpush.bf16.xpose.msra.mxu0 0
        %317 = vmatpush.bf16.xpose.msra.mxu0 0
        %318 = vmatpush.bf16.xpose.msra.mxu0 0
        %319 = vmatpush.bf16.xpose.msra.mxu0 0
        %320 = vmatpush.bf16.xpose.msra.mxu0 0
        %321 = vmatpush.bf16.xpose.msra.mxu0 0
        %322 = vmatpush.bf16.xpose.msra.mxu0 0
        %323 = vmatpush.bf16.xpose.msra.mxu0 %v314
        %324 = vmatmul.bf16.gmra.mxu0 %v311
        %v325 = vpop.f32.mrf.mxu0
        %v326 = vadd.f32 0.0, %v325
        %v327 = vpop.f32.mrf.mxu0
        %328 = vdwg.mxu0
        %v329 = vunpack.c.l.b16 %v292
        %v330 = vpack.c.b16 %v329, %v329
        %331 = vrot.lane.b32.xlu0 %v330, 96
        %v332 = vpop.permute.xlu0 %331
        %v334 = vsel %vm309, %v292, 0
        %v337 = vsel %vm309, %v332, 0
        %339 = vmatpush.bf16.xpose.msra.mxu0 0
        %340 = vmatpush.bf16.xpose.msra.mxu0 0
        %341 = vmatpush.bf16.xpose.msra.mxu0 0
        %342 = vmatpush.bf16.xpose.msra.mxu0 0
        %343 = vmatpush.bf16.xpose.msra.mxu0 0
        %344 = vmatpush.bf16.xpose.msra.mxu0 0
        %345 = vmatpush.bf16.xpose.msra.mxu0 0
        %346 = vmatpush.bf16.xpose.msra.mxu0 %v337
        %347 = vmatmul.bf16.gmra.mxu0 %v334
        %v348 = vpop.f32.mrf.mxu0
        %v349 = vadd.f32 0.0, %v348
        %v350 = vpop.f32.mrf.mxu0
        %351 = vdwg.mxu0
        %v352 = vunpack.c.l.b16 %v294
        %v353 = vpack.c.b16 %v352, %v352
        %354 = vrot.lane.b32.xlu0 %v353, 96
        %v355 = vpop.permute.xlu0 %354
        %v357 = vsel %vm309, %v294, 0
        %v360 = vsel %vm309, %v355, 0
        %362 = vmatpush.bf16.xpose.msra.mxu0 0
        %363 = vmatpush.bf16.xpose.msra.mxu0 0
        %364 = vmatpush.bf16.xpose.msra.mxu0 0
        %365 = vmatpush.bf16.xpose.msra.mxu0 0
        %366 = vmatpush.bf16.xpose.msra.mxu0 0
        %367 = vmatpush.bf16.xpose.msra.mxu0 0
        %368 = vmatpush.bf16.xpose.msra.mxu0 0
        %369 = vmatpush.bf16.xpose.msra.mxu0 %v360
        %370 = vmatmul.bf16.gmra.mxu0 %v357
        %v371 = vpop.f32.mrf.mxu0
        %v372 = vadd.f32 0.0, %v371
        %v373 = vpop.f32.mrf.mxu0
        %374 = vdwg.mxu0
        %v375 = vunpack.c.l.b16 %v296
        %v376 = vpack.c.b16 %v375, %v375
        %377 = vrot.lane.b32.xlu0 %v376, 96
        %v378 = vpop.permute.xlu0 %377
        %v380 = vsel %vm309, %v296, 0
        %v383 = vsel %vm309, %v378, 0
        %385 = vmatpush.bf16.xpose.msra.mxu0 0
        %386 = vmatpush.bf16.xpose.msra.mxu0 0
        %387 = vmatpush.bf16.xpose.msra.mxu0 0
        %388 = vmatpush.bf16.xpose.msra.mxu0 0
        %389 = vmatpush.bf16.xpose.msra.mxu0 0
        %390 = vmatpush.bf16.xpose.msra.mxu0 0
        %391 = vmatpush.bf16.xpose.msra.mxu0 0
        %392 = vmatpush.bf16.xpose.msra.mxu0 %v383
        %393 = vmatmul.bf16.gmra.mxu0 %v380
        %v394 = vpop.f32.mrf.mxu0
        %v395 = vadd.f32 0.0, %v394
        %v396 = vpop.f32.mrf.mxu0
        %397 = vdwg.mxu0
        %v398 = vunpack.c.l.b16 %v298
        %v399 = vpack.c.b16 %v398, %v398
        %400 = vrot.lane.b32.xlu0 %v399, 96
        %v401 = vpop.permute.xlu0 %400
        %v403 = vsel %vm309, %v298, 0
        %v406 = vsel %vm309, %v401, 0
        %408 = vmatpush.bf16.xpose.msra.mxu0 0
        %409 = vmatpush.bf16.xpose.msra.mxu0 0
        %410 = vmatpush.bf16.xpose.msra.mxu0 0
        %411 = vmatpush.bf16.xpose.msra.mxu0 0
        %412 = vmatpush.bf16.xpose.msra.mxu0 0
        %413 = vmatpush.bf16.xpose.msra.mxu0 0
        %414 = vmatpush.bf16.xpose.msra.mxu0 0
        %415 = vmatpush.bf16.xpose.msra.mxu0 %v406
        %416 = vmatmul.bf16.gmra.mxu0 %v403
        %v417 = vpop.f32.mrf.mxu0
        %v418 = vadd.f32 0.0, %v417
        %v419 = vpop.f32.mrf.mxu0
        %420 = vdwg.mxu0
        %v421 = vunpack.c.l.b16 %v300
        %v422 = vpack.c.b16 %v421, %v421
        %423 = vrot.lane.b32.xlu0 %v422, 96
        %v424 = vpop.permute.xlu0 %423
        %v426 = vsel %vm309, %v300, 0
        %v429 = vsel %vm309, %v424, 0
        %431 = vmatpush.bf16.xpose.msra.mxu0 0
        %432 = vmatpush.bf16.xpose.msra.mxu0 0
        %433 = vmatpush.bf16.xpose.msra.mxu0 0
        %434 = vmatpush.bf16.xpose.msra.mxu0 0
        %435 = vmatpush.bf16.xpose.msra.mxu0 0
        %436 = vmatpush.bf16.xpose.msra.mxu0 0
        %437 = vmatpush.bf16.xpose.msra.mxu0 0
        %438 = vmatpush.bf16.xpose.msra.mxu0 %v429
        %439 = vmatmul.bf16.gmra.mxu0 %v426
        %v440 = vpop.f32.mrf.mxu0
        %v441 = vadd.f32 0.0, %v440
        %v442 = vpop.f32.mrf.mxu0
        %443 = vdwg.mxu0
        %v444 = vunpack.c.l.b16 %v302
        %v445 = vpack.c.b16 %v444, %v444
        %446 = vrot.lane.b32.xlu0 %v445, 96
        %v447 = vpop.permute.xlu0 %446
        %v449 = vsel %vm309, %v302, 0
        %v452 = vsel %vm309, %v447, 0
        %454 = vmatpush.bf16.xpose.msra.mxu0 0
        %455 = vmatpush.bf16.xpose.msra.mxu0 0
        %456 = vmatpush.bf16.xpose.msra.mxu0 0
        %457 = vmatpush.bf16.xpose.msra.mxu0 0
        %458 = vmatpush.bf16.xpose.msra.mxu0 0
        %459 = vmatpush.bf16.xpose.msra.mxu0 0
        %460 = vmatpush.bf16.xpose.msra.mxu0 0
        %461 = vmatpush.bf16.xpose.msra.mxu0 %v452
        %462 = vmatmul.bf16.gmra.mxu0 %v449
        %v463 = vpop.f32.mrf.mxu0
        %v464 = vadd.f32 0.0, %v463
        %v465 = vpop.f32.mrf.mxu0
        %466 = vdwg.mxu0
        %v467 = vunpack.c.l.b16 %v304
        %v468 = vpack.c.b16 %v467, %v467
        %469 = vrot.lane.b32.xlu0 %v468, 96
        %v470 = vpop.permute.xlu0 %469
        %v472 = vsel %vm309, %v304, 0
        %v475 = vsel %vm309, %v470, 0
        %477 = vmatpush.bf16.xpose.msra.mxu0 0
        %478 = vmatpush.bf16.xpose.msra.mxu0 0
        %479 = vmatpush.bf16.xpose.msra.mxu0 0
        %480 = vmatpush.bf16.xpose.msra.mxu0 0
        %481 = vmatpush.bf16.xpose.msra.mxu0 0
        %482 = vmatpush.bf16.xpose.msra.mxu0 0
        %483 = vmatpush.bf16.xpose.msra.mxu0 0
        %484 = vmatpush.bf16.xpose.msra.mxu0 %v475
        %485 = vmatmul.bf16.gmra.mxu0 %v472
        %v486 = vpop.f32.mrf.mxu0
        %v487 = vadd.f32 0.0, %v486
        %v488 = vpop.f32.mrf.mxu0
        %489 = vdwg.mxu0
        %vm490 = vcmask 64512
        %v491 = vsel %vm490, %v326, -inf
        %492 = vmax.xlane.f32.xlu0 %v491
        %v493 = vpop.xlane.xlu0 %492
        %v494 = vsel %vm490, %v349, -inf
        %495 = vmax.xlane.f32.xlu0 %v494
        %v496 = vpop.xlane.xlu0 %495
        %v497 = vsel %vm490, %v372, -inf
        %498 = vmax.xlane.f32.xlu0 %v497
        %v499 = vpop.xlane.xlu0 %498
        %v500 = vsel %vm490, %v395, -inf
        %501 = vmax.xlane.f32.xlu0 %v500
        %v502 = vpop.xlane.xlu0 %501
        %v503 = vsel %vm490, %v418, -inf
        %504 = vmax.xlane.f32.xlu0 %v503
        %v505 = vpop.xlane.xlu0 %504
        %v506 = vsel %vm490, %v441, -inf
        %507 = vmax.xlane.f32.xlu0 %v506
        %v508 = vpop.xlane.xlu0 %507
        %v509 = vsel %vm490, %v464, -inf
        %510 = vmax.xlane.f32.xlu0 %v509
        %v511 = vpop.xlane.xlu0 %510
        %v512 = vsel %vm490, %v487, -inf
        %513 = vmax.xlane.f32.xlu0 %v512
        %v514 = vpop.xlane.xlu0 %513
        %v515 = vsub.f32 %v326, %v493
        %v516 = vsub.f32 %v349, %v496
        %v517 = vsub.f32 %v372, %v499
        %v518 = vsub.f32 %v395, %v502
        %v519 = vsub.f32 %v418, %v505
        %v520 = vsub.f32 %v441, %v508
        %v521 = vsub.f32 %v464, %v511
        %v522 = vsub.f32 %v487, %v514
        %v523 = vmul.f32 %v515, 1.442695
        %v524 = vpow.pop %v523
        %v525 = vmul.f32 %v516, 1.442695
        %v526 = vpow.pop %v525
        %v527 = vmul.f32 %v517, 1.442695
        %v528 = vpow.pop %v527
        %v529 = vmul.f32 %v518, 1.442695
        %v530 = vpow.pop %v529
        %v531 = vmul.f32 %v519, 1.442695
        %v532 = vpow.pop %v531
        %v533 = vmul.f32 %v520, 1.442695
        %v534 = vpow.pop %v533
        %v535 = vmul.f32 %v521, 1.442695
        %v536 = vpow.pop %v535
        %v537 = vmul.f32 %v522, 1.442695
        %v538 = vpow.pop %v537
        %v539 = vsel %vm490, %v524, 0.0
        %540 = vadd.xlane.f32.xlu0 %v539
        %v541 = vpop.xlane.xlu0 %540
        %v542 = vsel %vm490, %v526, 0.0
        %543 = vadd.xlane.f32.xlu0 %v542
        %v544 = vpop.xlane.xlu0 %543
        %v545 = vsel %vm490, %v528, 0.0
        %546 = vadd.xlane.f32.xlu0 %v545
        %v547 = vpop.xlane.xlu0 %546
        %v548 = vsel %vm490, %v530, 0.0
        %549 = vadd.xlane.f32.xlu0 %v548
        %v550 = vpop.xlane.xlu0 %549
        %v551 = vsel %vm490, %v532, 0.0
        %552 = vadd.xlane.f32.xlu0 %v551
        %v553 = vpop.xlane.xlu0 %552
        %v554 = vsel %vm490, %v534, 0.0
        %555 = vadd.xlane.f32.xlu0 %v554
        %v556 = vpop.xlane.xlu0 %555
        %v557 = vsel %vm490, %v536, 0.0
        %558 = vadd.xlane.f32.xlu0 %v557
        %v559 = vpop.xlane.xlu0 %558
        %v560 = vsel %vm490, %v538, 0.0
        %561 = vadd.xlane.f32.xlu0 %v560
        %v562 = vpop.xlane.xlu0 %561
        %v563 = vrcp.pop %v541
        %v564 = vrcp.pop %v544
        %v565 = vrcp.pop %v547
        %v566 = vrcp.pop %v550
        %v567 = vrcp.pop %v553
        %v568 = vrcp.pop %v556
        %v569 = vrcp.pop %v559
        %v570 = vrcp.pop %v562
        %v571 = vpack.c.bf16 %v524, %v524
        %v572 = vpack.c.bf16 %v526, %v526
        %v573 = vpack.c.bf16 %v528, %v528
        %v574 = vpack.c.bf16 %v530, %v530
        %v575 = vpack.c.bf16 %v532, %v532
        %v576 = vpack.c.bf16 %v534, %v534
        %v577 = vpack.c.bf16 %v536, %v536
        %v578 = vpack.c.bf16 %v538, %v538
        %579 = vrot.lane.b32.xlu0 %v306, 64
        %v580 = vpop.permute.xlu0 %579
        %v582 = vsel %vm490, %v571, 0
        %vm584 = vcmask 1043456
        %v586 = vsel %vm584, %v580, 0
        %588 = vmatpush.bf16.msra.mxu0 0
        %589 = vmatpush.bf16.msra.mxu0 0
        %590 = vmatpush.bf16.msra.mxu0 0
        %591 = vmatpush.bf16.msra.mxu0 0
        %592 = vmatpush.bf16.msra.mxu0 0
        %593 = vmatpush.bf16.msra.mxu0 0
        %594 = vmatpush.bf16.msra.mxu0 0
        %595 = vmatpush.bf16.msra.mxu0 %v586
        %596 = vmatmul.bf16.gmra.mxu0 %v582
        %v597 = vpop.f32.mrf.mxu0
        %v598 = vadd.f32 0.0, %v597
        %v599 = vpop.f32.mrf.mxu0
        %600 = vdwg.mxu0
        %601 = vrot.lane.b32.xlu0 %v330, 64
        %v602 = vpop.permute.xlu0 %601
        %v604 = vsel %vm490, %v572, 0
        %v607 = vsel %vm584, %v602, 0
        %609 = vmatpush.bf16.msra.mxu0 0
        %610 = vmatpush.bf16.msra.mxu0 0
        %611 = vmatpush.bf16.msra.mxu0 0
        %612 = vmatpush.bf16.msra.mxu0 0
        %613 = vmatpush.bf16.msra.mxu0 0
        %614 = vmatpush.bf16.msra.mxu0 0
        %615 = vmatpush.bf16.msra.mxu0 0
        %616 = vmatpush.bf16.msra.mxu0 %v607
        %617 = vmatmul.bf16.gmra.mxu0 %v604
        %v618 = vpop.f32.mrf.mxu0
        %v619 = vadd.f32 0.0, %v618
        %v620 = vpop.f32.mrf.mxu0
        %621 = vdwg.mxu0
        %622 = vrot.lane.b32.xlu0 %v353, 64
        %v623 = vpop.permute.xlu0 %622
        %v625 = vsel %vm490, %v573, 0
        %v628 = vsel %vm584, %v623, 0
        %630 = vmatpush.bf16.msra.mxu0 0
        %631 = vmatpush.bf16.msra.mxu0 0
        %632 = vmatpush.bf16.msra.mxu0 0
        %633 = vmatpush.bf16.msra.mxu0 0
        %634 = vmatpush.bf16.msra.mxu0 0
        %635 = vmatpush.bf16.msra.mxu0 0
        %636 = vmatpush.bf16.msra.mxu0 0
        %637 = vmatpush.bf16.msra.mxu0 %v628
        %638 = vmatmul.bf16.gmra.mxu0 %v625
        %v639 = vpop.f32.mrf.mxu0
        %v640 = vadd.f32 0.0, %v639
        %v641 = vpop.f32.mrf.mxu0
        %642 = vdwg.mxu0
        %643 = vrot.lane.b32.xlu0 %v376, 64
        %v644 = vpop.permute.xlu0 %643
        %v646 = vsel %vm490, %v574, 0
        %v649 = vsel %vm584, %v644, 0
        %651 = vmatpush.bf16.msra.mxu0 0
        %652 = vmatpush.bf16.msra.mxu0 0
        %653 = vmatpush.bf16.msra.mxu0 0
        %654 = vmatpush.bf16.msra.mxu0 0
        %655 = vmatpush.bf16.msra.mxu0 0
        %656 = vmatpush.bf16.msra.mxu0 0
        %657 = vmatpush.bf16.msra.mxu0 0
        %658 = vmatpush.bf16.msra.mxu0 %v649
        %659 = vmatmul.bf16.gmra.mxu0 %v646
        %v660 = vpop.f32.mrf.mxu0
        %v661 = vadd.f32 0.0, %v660
        %v662 = vpop.f32.mrf.mxu0
        %663 = vdwg.mxu0
        %664 = vrot.lane.b32.xlu0 %v399, 64
        %v665 = vpop.permute.xlu0 %664
        %v667 = vsel %vm490, %v575, 0
        %v670 = vsel %vm584, %v665, 0
        %672 = vmatpush.bf16.msra.mxu0 0
        %673 = vmatpush.bf16.msra.mxu0 0
        %674 = vmatpush.bf16.msra.mxu0 0
        %675 = vmatpush.bf16.msra.mxu0 0
        %676 = vmatpush.bf16.msra.mxu0 0
        %677 = vmatpush.bf16.msra.mxu0 0
        %678 = vmatpush.bf16.msra.mxu0 0
        %679 = vmatpush.bf16.msra.mxu0 %v670
        %680 = vmatmul.bf16.gmra.mxu0 %v667
        %v681 = vpop.f32.mrf.mxu0
        %v682 = vadd.f32 0.0, %v681
        %v683 = vpop.f32.mrf.mxu0
        %684 = vdwg.mxu0
        %685 = vrot.lane.b32.xlu0 %v422, 64
        %v686 = vpop.permute.xlu0 %685
        %v688 = vsel %vm490, %v576, 0
        %v691 = vsel %vm584, %v686, 0
        %693 = vmatpush.bf16.msra.mxu0 0
        %694 = vmatpush.bf16.msra.mxu0 0
        %695 = vmatpush.bf16.msra.mxu0 0
        %696 = vmatpush.bf16.msra.mxu0 0
        %697 = vmatpush.bf16.msra.mxu0 0
        %698 = vmatpush.bf16.msra.mxu0 0
        %699 = vmatpush.bf16.msra.mxu0 0
        %700 = vmatpush.bf16.msra.mxu0 %v691
        %701 = vmatmul.bf16.gmra.mxu0 %v688
        %v702 = vpop.f32.mrf.mxu0
        %v703 = vadd.f32 0.0, %v702
        %v704 = vpop.f32.mrf.mxu0
        %705 = vdwg.mxu0
        %706 = vrot.lane.b32.xlu0 %v445, 64
        %v707 = vpop.permute.xlu0 %706
        %v709 = vsel %vm490, %v577, 0
        %v712 = vsel %vm584, %v707, 0
        %714 = vmatpush.bf16.msra.mxu0 0
        %715 = vmatpush.bf16.msra.mxu0 0
        %716 = vmatpush.bf16.msra.mxu0 0
        %717 = vmatpush.bf16.msra.mxu0 0
        %718 = vmatpush.bf16.msra.mxu0 0
        %719 = vmatpush.bf16.msra.mxu0 0
        %720 = vmatpush.bf16.msra.mxu0 0
        %721 = vmatpush.bf16.msra.mxu0 %v712
        %722 = vmatmul.bf16.gmra.mxu0 %v709
        %v723 = vpop.f32.mrf.mxu0
        %v724 = vadd.f32 0.0, %v723
        %v725 = vpop.f32.mrf.mxu0
        %726 = vdwg.mxu0
        %727 = vrot.lane.b32.xlu0 %v468, 64
        %v728 = vpop.permute.xlu0 %727
        %v730 = vsel %vm490, %v578, 0
        %v733 = vsel %vm584, %v728, 0
        %735 = vmatpush.bf16.msra.mxu0 0
        %736 = vmatpush.bf16.msra.mxu0 0
        %737 = vmatpush.bf16.msra.mxu0 0
        %738 = vmatpush.bf16.msra.mxu0 0
        %739 = vmatpush.bf16.msra.mxu0 0
        %740 = vmatpush.bf16.msra.mxu0 0
        %741 = vmatpush.bf16.msra.mxu0 0
        %742 = vmatpush.bf16.msra.mxu0 %v733
        %743 = vmatmul.bf16.gmra.mxu0 %v730
        %v744 = vpop.f32.mrf.mxu0
        %v745 = vadd.f32 0.0, %v744
        %v746 = vpop.f32.mrf.mxu0
        %747 = vdwg.mxu0
        %v748 = vmul.f32 %v598, %v563
        %v749 = vmul.f32 %v619, %v564
        %v750 = vmul.f32 %v640, %v565
        %v751 = vmul.f32 %v661, %v566
        %v752 = vmul.f32 %v682, %v567
        %v753 = vmul.f32 %v703, %v568
        %v754 = vmul.f32 %v724, %v569
        %v755 = vmul.f32 %v745, %v570
        %v756 = vpack.c.bf16 %v748, %v748
        %v757 = vpack.c.bf16 %v749, %v749
        %v758 = vpack.c.bf16 %v750, %v750
        %v759 = vpack.c.bf16 %v751, %v751
        %v760 = vpack.c.bf16 %v752, %v752
        %v761 = vpack.c.bf16 %v753, %v753
        %v762 = vpack.c.bf16 %v754, %v754
        %v763 = vpack.c.bf16 %v755, %v755
        %v765 = vunpack.c.l.b16 %v757
        %v766 = vpack.c.b16 %v765, %v765
        %767 = vrot.lane.b32.xlu0 %v766, 4
        %v768 = vpop.permute.xlu0 %767
        %v770 = vunpack.c.l.b16 %v758
        %v771 = vpack.c.b16 %v770, %v770
        %772 = vrot.lane.b32.xlu0 %v771, 8
        %v773 = vpop.permute.xlu0 %772
        %v775 = vunpack.c.l.b16 %v759
        %v776 = vpack.c.b16 %v775, %v775
        %777 = vrot.lane.b32.xlu0 %v776, 12
        %v778 = vpop.permute.xlu0 %777
        %v780 = vunpack.c.l.b16 %v760
        %v781 = vpack.c.b16 %v780, %v780
        %782 = vrot.lane.b32.xlu0 %v781, 16
        %v783 = vpop.permute.xlu0 %782
        %v785 = vunpack.c.l.b16 %v761
        %v786 = vpack.c.b16 %v785, %v785
        %787 = vrot.lane.b32.xlu0 %v786, 20
        %v788 = vpop.permute.xlu0 %787
        %v790 = vunpack.c.l.b16 %v762
        %v791 = vpack.c.b16 %v790, %v790
        %792 = vrot.lane.b32.xlu0 %v791, 24
        %v793 = vpop.permute.xlu0 %792
        %v795 = vunpack.c.l.b16 %v763
        %v796 = vpack.c.b16 %v795, %v795
        %797 = vrot.lane.b32.xlu0 %v796, 28
        %v798 = vpop.permute.xlu0 %797
        %v801 = vsel %vm309, %v756, %v768
        %v803 = vsel %vm490, %v801, %v773
        %vm804 = vcmask 97280
        %v806 = vsel %vm804, %v803, %v778
        %vm807 = vcmask 130048
        %v809 = vsel %vm807, %v806, %v783
        %vm810 = vcmask 162816
        %v812 = vsel %vm810, %v809, %v788
        %vm813 = vcmask 195584
        %v815 = vsel %vm813, %v812, %v793
        %vm816 = vcmask 228352
        %v818 = vsel %vm816, %v815, %v798
        %v820 = vperm.slane %v259, 0
        %v826 = vunpack.c.l.b16 %v255
        %v827 = vunpack.c.l.b16 %v256
        %v828 = vunpack.c.l.b16 %v257
        %v829 = vunpack.c.l.b16 %v258
        %v830 = vpack.c.b16 %v827, %v826
        %v831 = vpack.c.b16 %v829, %v828
        %v834 = vsel %vm272, %v818, 0
        %836 = vmatpush.bf16.msra.mxu0 0
        %837 = vmatpush.bf16.msra.mxu0 0
        %838 = vmatpush.bf16.msra.mxu0 0
        %839 = vmatpush.bf16.msra.mxu0 0
        %840 = vmatpush.bf16.msra.mxu0 0
        %841 = vmatpush.bf16.msra.mxu0 0
        %842 = vmatpush.bf16.msra.mxu0 %v831
        %843 = vmatpush.bf16.msra.mxu0 %v830
        %844 = vmatmul.bf16.gmra.mxu0 %v834
        %v845 = vpop.f32.mrf.mxu0
        %v846 = vadd.f32 %v820, %v845
        %v847 = vpop.f32.mrf.mxu0
        %848 = vdwg.mxu0
        %849 = vst.msk [vmem:[%s247] sm:$0xff] %vm272, %v846
        %s850 = sand.u32 %s119, 1
        %s851 = scalar_lea.sflag [#allocation4], %s850
        %s852 = sand.u32 %s119, 1
        %s853 = smul.addr %s852, 8
        %s854 = scalar_lea.vmem [#allocation8], %s853
        // Predicated region
        $region49: #{tpu_custom_call.1} parent=35 // pred_check
          %p855 = pneg %p129
        $region50: #{tpu_custom_call.1} parent=35 // pred_check_branch
          %857 = sbr.rel (%p855) target = $region52
        $region51: #{tpu_custom_call.1} parent=35 // pred_region
          %859 = vsyncadd %s851, 0
          %s860 = smul.addr %s22, 8
          %s861 = scalar_lea.hbm %s4, %s860
          %s863 = sshll.u32 %s854, 4
          %s864 = int_to_ptr.vmem [resolvable:$true] %s863
          %s865 = sshll.u32 %s861, 4
          %s866 = int_to_ptr.hbm [resolvable:$true] %s865
          %868 = dma.vmem_to_hbm [thread:$0]  %s864, 128, %s866, %s851
        $region52: #{tpu_custom_call.1} parent=35 // pred_fallthru
          _
      $region36: #{tpu_custom_call.1} parent=5 // pred_fallthru
        _
      %p869 = scmp.le.s32.totalorder 2, %s17
      // Predicated region
      $region53: #{tpu_custom_call.1} parent=5 // pred_check
        %p870 = pneg %p869
      $region54: #{tpu_custom_call.1} parent=5 // pred_check_branch
        %872 = sbr.rel (%p870) target = $region56
      $region55: #{tpu_custom_call.1} parent=5 // pred_region
        %s873 = ssub.s32 %s17, 2
        // Predicated region
        $region57: #{tpu_custom_call.1} parent=55 // pred_check
          %p874 = pneg %p135
        $region58: #{tpu_custom_call.1} parent=55 // pred_check_branch
          %876 = sbr.rel (%p874) target = $region60
        $region59: #{tpu_custom_call.1} parent=55 // pred_region
          %s877 = sand.u32 %s120, 1
          %s878 = scalar_lea.sflag [#allocation4], %s877
          %s879 = sand.u32 %s120, 1
          %s880 = smul.addr %s879, 8
          %s881 = scalar_lea.vmem [#allocation8], %s880
          %883 = dma.done %s878, 128
        $region60: #{tpu_custom_call.1} parent=55 // pred_fallthru
          _
      $region56: #{tpu_custom_call.1} parent=5 // pred_fallthru
        _
    $region6: #{tpu_custom_call.1} parent=1 // loop_footer
      %s21 = sadd.s32 1, %s17
    $region7: #{tpu_custom_call.1} parent=1 // loop_footer_branch
      %16 = sbr.rel target = $region3
    $region8: #{tpu_custom_call.1} parent=1 // loop_exit
      _
    %884 = vsyncpa [#allocation3], 1
    %s885 = scalar_lea.sflag [#allocation3], 1
    %886 = vsyncpa %s885, 1
    %887 = vsyncpa [#allocation6], 1
    %888 = vsyncpa [#allocation4], 1
    %s889 = scalar_lea.sflag [#allocation4], 1
    %890 = vsyncpa %s889, 1

</llo_original>
